<compile_context>
chip_gen: v5e
topology: v5e:2x2
jax: 0.10.0
libtpu: 0.0.40
codegen_flags: <defaults>
</compile_context>

<pallas_src>
import jax
import jax.numpy as jnp
from jax.experimental import pallas as pl
from jax.experimental.pallas import tpu as pltpu


def _binary_classification_kernel(x_ref, wd_ref, bd_ref, o_ref):
    # x_ref: (tb, H) VMEM    wd_ref: (1, H) VMEM (lane-dense)
    # bd_ref: (1,)  SMEM     o_ref: (tb, 2) VMEM
    x = x_ref[...].astype(jnp.float32)
    wd = wd_ref[...].astype(jnp.float32)                        # (1, H)
    d = jnp.sum(x * wd, axis=-1, keepdims=True) + bd_ref[0]     # (tb, 1) logit diff
    # Numerically stable softplus(d) = max(d, 0) + log1p(exp(-|d|)).
    sp = jnp.maximum(d, 0.0) + jnp.log1p(jnp.exp(-jnp.abs(d)))
    # log_softmax = [-softplus(d), d - softplus(d)]
    out = jnp.concatenate([-sp, d - sp], axis=-1)               # (tb, 2)
    o_ref[...] = out.astype(o_ref.dtype)
    # TODO(synk): for tiny H the 2/128-lane-sparse store is the exposed cost; a
    # class-major (2, tb) output (lane-dense along batch) would fix it but needs
    # a (tb, 1) -> (1, tb) in-kernel relayout; skipped to keep lowering robust.


def _default_vmem_limit():
    """~75% of reported VMEM (v7x: ~48 MiB of 64; v5e/v6e: ~96 MiB of 128)."""
    try:
        cap = int(pltpu.get_tpu_info().vmem_capacity_bytes)
        return max(32 * 1024 * 1024, min(cap * 3 // 4, 96 * 1024 * 1024))
    except Exception:
        return 48 * 1024 * 1024


def _pick_tile_batch(batch, hidden, itemsize, requested, vmem_limit_bytes):
    """Rows per grid step: sized by bytes/step, VMEM budget, sublane granularity."""
    sub = max(8, 32 // itemsize)                # f32 -> 8, bf16 -> 16, int8/fp8 -> 32
    if batch <= max(sub, 64):
        return batch                            # single full-extent block, no masking
    budget = int(vmem_limit_bytes * 0.7)        # headroom for compiler scratch
    # x double-buffered + 128-lane-padded (tb, 2) output double-buffered (per row),
    # plus the (1, H) lane-dense weight-difference vector (double-buffered).
    per_row = 2 * hidden * itemsize + 2 * 128 * 4
    wd_bytes = 2 * 8 * (pl.cdiv(hidden, 128) * 128) * 4
    max_tb = max(sub, ((budget - wd_bytes) // per_row) // sub * sub)
    if requested is None:
        # Target >= ~2 MiB of x per grid step to amortize per-step overhead.
        requested = min(max(pl.cdiv(2 * 1024 * 1024, hidden * itemsize), 128), 4096)
    tb = min(requested, max_tb)
    # Keep >= 2 grid steps so the parallel axis can shard across v7x's 2 TensorCores.
    tb = min(tb, pl.cdiv(pl.cdiv(batch, 2), sub) * sub)
    # Floor so at least one full block fits; the edge block is masked by Mosaic.
    tb = min(tb, batch // sub * sub)
    return max(sub, tb)


def binary_classification(x, weight, bias, *, tile_batch=None, vmem_limit_bytes=None):
    """x: (B, H); weight: (2, H) (PyTorch nn.Linear layout); bias: (2,)."""
    B, H = x.shape
    out_dtype = x.dtype
    if vmem_limit_bytes is None:
        vmem_limit_bytes = _default_vmem_limit()

    # Compute the class-difference parameters in f32 BEFORE any cast (avoids
    # cancellation if the two class rows are close).
    wd = (weight[1].astype(jnp.float32) - weight[0].astype(jnp.float32)).reshape(1, H)
    bd = (bias[1].astype(jnp.float32) - bias[0].astype(jnp.float32)).reshape(1)

    itemsize = jnp.dtype(x.dtype).itemsize
    tb = _pick_tile_batch(B, H, itemsize, tile_batch, vmem_limit_bytes)
    grid = (pl.cdiv(B, tb),)

    cost = pl.CostEstimate(
        flops=2 * B * H,
        transcendentals=2 * B,
        bytes_accessed=B * H * itemsize + B * 2 * itemsize + H * 4 + 4,
    )

    return pl.pallas_call(
        _binary_classification_kernel,
        out_shape=jax.ShapeDtypeStruct((B, 2), out_dtype),
        grid_spec=pltpu.PrefetchScalarGridSpec(
            num_scalar_prefetch=0,
            grid=grid,
            in_specs=[
                pl.BlockSpec((tb, H), lambda i: (i, 0)),
                pl.BlockSpec((1, H), lambda i: (0, 0)),
                pl.BlockSpec(memory_space=pltpu.MemorySpace.SMEM),
            ],
            out_specs=pl.BlockSpec((tb, 2), lambda i: (i, 0)),
        ),
        compiler_params=pltpu.CompilerParams(
            dimension_semantics=("parallel",),
            vmem_limit_bytes=vmem_limit_bytes,
        ),
        cost_estimate=cost,
    )(x, wd, bd)


def _reference(x, weight, bias):
    return jax.nn.log_softmax(x.astype(jnp.float32) @ weight.T + bias, axis=-1)


if __name__ == "__main__":
    hidden_dim = 32
    key = jax.random.PRNGKey(0)
    kx, kw, kb, kx2, kx3 = jax.random.split(key, 5)

    # PyTorch nn.Linear default init: U(-1/sqrt(H), 1/sqrt(H))
    bound = 1.0 / (hidden_dim ** 0.5)
    weight = jax.random.uniform(kw, (2, hidden_dim), jnp.float32, -bound, bound)
    bias = jax.random.uniform(kb, (2,), jnp.float32, -bound, bound)

    # 1) Small batch, exact f32 parity (single full-extent block).
    x = jax.random.normal(kx, (8, hidden_dim), jnp.float32)
    out = binary_classification(x, weight, bias)
    jax.block_until_ready(out)
    ref = _reference(x, weight, bias)
    assert out.shape == (8, 2)
    assert jnp.allclose(out, ref, atol=1e-5, rtol=1e-5), "f32 path mismatch"

    # 2) Batch not a multiple of 8 — full-extent block, no padding copies.
    x2 = jax.random.normal(kx2, (13, hidden_dim), jnp.float32)
    out2 = binary_classification(x2, weight, bias)
    jax.block_until_ready(out2)
    ref2 = _reference(x2, weight, bias)
    assert out2.shape == (13, 2)
    assert jnp.allclose(out2, ref2, atol=1e-5, rtol=1e-5), "odd-batch path mismatch"

    # 3) Larger batch — tiled grid (>=2 parallel steps) with masked edge block.
    x3 = jax.random.normal(kx3, (1000, hidden_dim), jnp.float32)
    out3 = binary_classification(x3, weight, bias)
    jax.block_until_ready(out3)
    ref3 = _reference(x3, weight, bias)
    assert out3.shape == (1000, 2)
    assert jnp.allclose(out3, ref3, atol=1e-5, rtol=1e-5), "tiled/masked path mismatch"

    # 4) x already bf16 in HBM (no wrapper-side cast), relaxed tolerance.
    out_bf = binary_classification(x.astype(jnp.bfloat16), weight, bias)
    jax.block_until_ready(out_bf)
    assert out_bf.shape == (8, 2)
    assert jnp.allclose(out_bf.astype(jnp.float32), ref, atol=5e-2, rtol=5e-2), \
        "bf16 path mismatch"

    print("KERNEL_OK")
</pallas_src>

<mosaic_0001>
module attributes {stable_mosaic.version = 11 : i64} {
  func.func @_binary_classification_kernel(%arg0: i32, %arg1: memref<8x32xf32, #tpu.memory_space<vmem>>, %arg2: memref<1x32xf32, #tpu.memory_space<vmem>>, %arg3: memref<1xf32, #tpu.memory_space<smem>>, %arg4: memref<8x2xf32, #tpu.memory_space<vmem>>) attributes {dimension_semantics = [#tpu.dimension_semantics<parallel>], iteration_bounds = array<i64: 1>, scalar_prefetch = 0 : i64, scratch_operands = 0 : i64, tpu.core_type = #tpu.core_type<tc>, window_params = [{transform_indices = @transform_0, window_bounds = array<i64: 8, 32>}, {pipeline_mode = #tpu.pipeline_mode<synchronous>, transform_indices = @transform_1, window_bounds = array<i64: 1, 32>}, {transform_indices = @transform_2, window_bounds = array<i64: 1>}, {transform_indices = @transform_3, window_bounds = array<i64: 8, 2>}]} {
    %c0 = arith.constant 0 : index
    %c0_0 = arith.constant 0 : index
    %0 = vector.load %arg1[%c0, %c0_0] : memref<8x32xf32, #tpu.memory_space<vmem>>, vector<8x32xf32>
    %c0_1 = arith.constant 0 : index
    %c0_2 = arith.constant 0 : index
    %1 = vector.load %arg2[%c0_1, %c0_2] : memref<1x32xf32, #tpu.memory_space<vmem>>, vector<1x32xf32>
    %2 = vector.broadcast %1 : vector<1x32xf32> to vector<8x32xf32>
    %3 = arith.mulf %0, %2 : vector<8x32xf32>
    %cst = arith.constant dense<0.000000e+00> : vector<8xf32>
    %4 = vector.multi_reduction <add>, %3, %cst [1] : vector<8x32xf32> to vector<8xf32>
    %5 = vector.shape_cast %4 : vector<8xf32> to vector<8x1xf32>
    %c0_3 = arith.constant 0 : index
    %6 = memref.load %arg3[%c0_3] : memref<1xf32, #tpu.memory_space<smem>>
    %7 = vector.broadcast %6 : f32 to vector<8x1xf32>
    %8 = arith.addf %5, %7 : vector<8x1xf32>
    %cst_4 = arith.constant 0.000000e+00 : f32
    %9 = vector.broadcast %cst_4 : f32 to vector<8x1xf32>
    %10 = arith.maximumf %8, %9 : vector<8x1xf32>
    %11 = math.absf %8 : vector<8x1xf32>
    %cst_5 = arith.constant 0.000000e+00 : f32
    %12 = vector.broadcast %cst_5 : f32 to vector<8x1xf32>
    %13 = arith.subf %12, %11 : vector<8x1xf32>
    %14 = math.exp %13 : vector<8x1xf32>
    %15 = math.log1p %14 : vector<8x1xf32>
    %16 = arith.addf %10, %15 : vector<8x1xf32>
    %cst_6 = arith.constant 0.000000e+00 : f32
    %17 = vector.broadcast %cst_6 : f32 to vector<8x1xf32>
    %18 = arith.subf %17, %16 : vector<8x1xf32>
    %19 = arith.subf %8, %16 : vector<8x1xf32>
    %20 = tpu.concatenate %18, %19 in 1 : vector<8x1xf32>, vector<8x1xf32> -> vector<8x2xf32>
    %c0_7 = arith.constant 0 : index
    %c0_8 = arith.constant 0 : index
    %21 = vector.load %arg4[%c0_7, %c0_8] : memref<8x2xf32, #tpu.memory_space<vmem>>, vector<8x2xf32>
    tpu.vector_store %arg4[%c0_7, %c0_8], %20 {strides = array<i32>} : memref<8x2xf32, #tpu.memory_space<vmem>>, vector<8x2xf32>,
    return
  }
  func.func @transform_0(%arg0: i32) -> (i32, i32) {
    %c0_i32 = arith.constant 0 : i32
    %c0_i32_0 = arith.constant 0 : i32
    return %arg0, %c0_i32 : i32, i32
  }
  func.func @transform_1(%arg0: i32) -> (i32, i32) {
    %c0_i32 = arith.constant 0 : i32
    %c0_i32_0 = arith.constant 0 : i32
    %c0_i32_1 = arith.constant 0 : i32
    return %c0_i32, %c0_i32_0 : i32, i32
  }
  func.func @transform_2(%arg0: i32) -> i32 {
    %c0_i32 = arith.constant 0 : i32
    %c0_i32_0 = arith.constant 0 : i32
    return %c0_i32 : i32
  }
  func.func @transform_3(%arg0: i32) -> (i32, i32) {
    %c0_i32 = arith.constant 0 : i32
    %c0_i32_0 = arith.constant 0 : i32
    return %arg0, %c0_i32 : i32, i32
  }
}

</mosaic_0001>

<llo_original>
// kernel: tpu_custom_call.1
$region0: #{tpu_custom_call.1}
  #allocation0 [shape = 'u32[]', space=smem, size = 0x4, offset = 0x4, fixed_abs, tag = 'smem constant byte address 0x4 - core index']
  #allocation1 [shape = 'u32[72,128]{1,0:T(1,128)}', space=vmem, size = 0x9000, scoped, tag = 'internal scratch']
  #allocation2 [shape = 'f32[1]{0:T(128)S(6)}', space=smem, size = 0x200, scoped, tag = 'scoped memory for tpu_custom_call.1']
  %s0 = inlined_call_operand.hbm [shape: f32[8,32], index: 0, kind: input, shape index: {}]
  %s1 = inlined_call_operand.vmem [shape: f32[1,32], index: 1, kind: input, shape index: {}]
  %s2 = inlined_call_operand.<no memory space> [shape: f32[1], index: 2, kind: input, shape index: {}]
  %s3 = inlined_call_operand.vmem [shape: f32[8,2], index: 3, kind: output, shape index: {}]
  %s4 = sld [smem:[#allocation0]]
  $region26: #{tpu_custom_call.1} parent=0
    _
  %s6 = ssub.s32 1, %s4
  %s7 = scalar_select 0, %s6, %s4
  %8 = sst [smem:[#allocation2]] %s2
  $region1: #{tpu_custom_call.1} parent=0
    #allocation3 [shape = 'u8[4096]{0}', space=vmem, size = 0x1000, scoped, tag = 'input window, operand 0, single buffered']
    #allocation4 [shape = 's32[1]{0}', space=sflag, size = 0x4, scoped, tag = 'scoped memory for tpu_custom_call.1']
    %9 = vsyncpa [#allocation4], 0
    // Predicated region
    $region2: #{tpu_custom_call.1} parent=1 // pred_check
      _
    $region3: #{tpu_custom_call.1} parent=1 // pred_check_branch
      %11 = sbr.rel (0) target = $region5
    $region4: #{tpu_custom_call.1} parent=1 // pred_region
      %13 = vsyncadd [#allocation4], 0
      %s15 = sshll.u32 %s0, 4
      %s16 = int_to_ptr.hbm [resolvable:$true] %s15
      %s17 = sshll.u32 [#allocation3], 4
      %s18 = int_to_ptr.vmem [resolvable:$true] %s17
      %20 = dma.hbm_to_vmem [thread:$0]  %s16, 128, %s18, [#allocation4]
    $region5: #{tpu_custom_call.1} parent=1 // pred_fallthru
      _
    // Predicated region
    $region6: #{tpu_custom_call.1} parent=1 // pred_check
      _
    $region7: #{tpu_custom_call.1} parent=1 // pred_check_branch
      %22 = sbr.rel (0) target = $region9
    $region8: #{tpu_custom_call.1} parent=1 // pred_region
      _
    $region9: #{tpu_custom_call.1} parent=1 // pred_fallthru
      _
    // Predicated region
    $region10: #{tpu_custom_call.1} parent=1 // pred_check
      _
    $region11: #{tpu_custom_call.1} parent=1 // pred_check_branch
      %24 = sbr.rel (0) target = $region13
    $region12: #{tpu_custom_call.1} parent=1 // pred_region
      _
    $region13: #{tpu_custom_call.1} parent=1 // pred_fallthru
      _
    // Predicated region
    $region14: #{tpu_custom_call.1} parent=1 // pred_check
      _
    $region15: #{tpu_custom_call.1} parent=1 // pred_check_branch
      %26 = sbr.rel (0) target = $region17
    $region16: #{tpu_custom_call.1} parent=1 // pred_region
      %28 = dma.done [#allocation4], 128
    $region17: #{tpu_custom_call.1} parent=1 // pred_fallthru
      _
    %v29 = vld [vmem:[#allocation3] sm:$0xff]
    %v30 = vld [vmem:[%s1] sm:$0x1]
    %v32 = vperm.slane %v30, 0
    %v34 = vmul.f32 %v29, %v32
    %vm35 = vcmask 261120
    %v36 = vsel %vm35, %v34, 0.0
    %37 = vadd.xlane.f32.xlu0 %v36
    %v38 = vpop.xlane.xlu0 %37
    %s39 = sld [smem:[#allocation2]]
    %v40 = vstv %s39
    %v41 = vadd.f32 %v38, %v40
    %v42 = vmax.f32 %v41, 0.0
    %v43 = vand.u32 2147483647, %v41
    %v44 = vsub.f32 0.0, %v43
    %v45 = vmul.f32 %v44, 1.442695
    %v46 = vpow.pop %v45
    %v47 = vadd.f32 %v46, 1.0
    %v48 = vlog2.pop %v47
    %v49 = vmul.f32 %v48, 0.6931472
    %v50 = vmul.f32 -0.5, %v46
    %v51 = vadd.f32 %v50, 1.0
    %v52 = vmul.f32 %v51, %v46
    %v53 = vand.u32 2147483647, %v46
    %vm54 = vcmp.lt.f32.partialorder %v53, 0.0004427343
    %v55 = vsel %vm54, %v52, %v49
    %v56 = vadd.f32 %v42, %v55
    %v57 = vsub.f32 0.0, %v56
    %v58 = vsub.f32 %v41, %v56
    %vm59 = vcmask 7168
    %v60 = vsel %vm59, %v57, %v58
    %vm61 = vcmask 15360
    %62 = vst.msk [vmem:[%s3] sm:$0xff] %vm61, %v60
    // Predicated region
    $region18: #{tpu_custom_call.1} parent=1 // pred_check
      _
    $region19: #{tpu_custom_call.1} parent=1 // pred_check_branch
      %64 = sbr.rel (0) target = $region21
    $region20: #{tpu_custom_call.1} parent=1 // pred_region
      _
    $region21: #{tpu_custom_call.1} parent=1 // pred_fallthru
      _
    // Predicated region
    $region22: #{tpu_custom_call.1} parent=1 // pred_check
      _
    $region23: #{tpu_custom_call.1} parent=1 // pred_check_branch
      %66 = sbr.rel (0) target = $region25
    $region24: #{tpu_custom_call.1} parent=1 // pred_region
      _
    $region25: #{tpu_custom_call.1} parent=1 // pred_fallthru
      _
    %67 = vsyncpa [#allocation4], 1

</llo_original>
